<compile_context>
chip_gen: v5e
topology: v5e:2x2
jax: 0.10.0
libtpu: 0.0.40
codegen_flags: <defaults>
</compile_context>

<pallas_src>
import math
import jax
import jax.numpy as jnp
from jax import lax
from jax.experimental import pallas as pl
from jax.experimental.pallas import tpu as pltpu


BN_EPS = 1e-5
FEAT = 128  # lane width used for every hidden activation / middle weight


def _ae_kernel(x_ref, w_first_ref, w_mid_ref, w_last_ref, vec_ref, b_last_ref, out_ref):
    """Whole forward pass on one VMEM-resident batch (training-mode BN needs full-batch
    statistics, so the batch stays resident; see TODO in ae_forward for the streaming path).

    x_ref:       (B, dim)       f32   raw input (no padding)
    w_first_ref: (dim, 128)     bf16  Linear 1 weight, stored (in, out)
    w_mid_ref:   (4, 128, 128)  bf16  Linears 2..5 weights (in, out), zero-padded
    w_last_ref:  (128, dim)     bf16  final Linear weight (in, out)
    vec_ref:     (15, 128)      f32   rows 0..4 biases b1..b5, 5..9 gammas, 10..14 betas
    b_last_ref:  (1, dim)       f32   final Linear bias
    out_ref:     (B, dim)       f32
    """
    inv_b = 1.0 / x_ref.shape[0]  # static batch size -> compile-time constant

    def bn_relu(a, li):
        # a: (B, 128) f32 pre-activation (linear bias already added).
        # Training-mode BatchNorm1d: biased variance, centered two-pass for stability,
        # affine folded into a single per-feature scale/shift.
        mean = jnp.sum(a, axis=0, keepdims=True) * inv_b
        centered = a - mean
        var = jnp.sum(centered * centered, axis=0, keepdims=True) * inv_b
        gamma = vec_ref[pl.ds(5 + li, 1), :]
        beta = vec_ref[pl.ds(10 + li, 1), :]
        scale = gamma * lax.rsqrt(var + BN_EPS)
        # ReLU; carry the activation in bf16 for the next MXU matmul.
        return jnp.maximum(centered * scale + beta, 0.0).astype(jnp.bfloat16)

    # Layer 1: (B, dim) @ (dim, 128) -- small K handled by the MXU, no lane padding of x.
    a = jnp.dot(x_ref[...].astype(jnp.bfloat16), w_first_ref[...],
                preferred_element_type=jnp.float32)
    h = bn_relu(a + vec_ref[pl.ds(0, 1), :], 0)
    # Layers 2..5: (B, 128) @ (128, 128), each followed by BN + ReLU.
    for li in range(1, 5):
        a = jnp.dot(h, w_mid_ref[li - 1], preferred_element_type=jnp.float32)
        h = bn_relu(a + vec_ref[pl.ds(li, 1), :], li)
    # Final Linear: (B, 128) @ (128, dim), no BN / ReLU; only real columns are written.
    y = jnp.dot(h, w_last_ref[...], preferred_element_type=jnp.float32)
    out_ref[...] = (y + b_last_ref[...]).astype(out_ref.dtype)


def pack_params(linears, bn_scales, bn_shifts, feat=FEAT):
    """linears: 6 x (W (in, out) f32, b (out,) f32); bn_scales/bn_shifts: 5 x (n,) f32.
    Padding: weight rows/cols -> 0, bias -> 0, gamma -> 1, beta -> 0, so padded feature
    lanes stay exactly zero through the whole network and never perturb BN statistics."""
    (w1, _), (w6, b6) = linears[0], linears[5]
    w_first = jnp.pad(w1, ((0, 0), (0, feat - w1.shape[1]))).astype(jnp.bfloat16)
    w_mid = jnp.stack([
        jnp.pad(w, ((0, feat - w.shape[0]), (0, feat - w.shape[1])))
        for w, _ in linears[1:5]
    ]).astype(jnp.bfloat16)
    w_last = jnp.pad(w6, ((0, feat - w6.shape[0]), (0, 0))).astype(jnp.bfloat16)
    vecs = [jnp.pad(b, (0, feat - b.shape[0])) for _, b in linears[:5]]        # 5 biases
    vecs += [jnp.pad(g, (0, feat - g.shape[0]), constant_values=1.0)
             for g in bn_scales]                                               # 5 gammas
    vecs += [jnp.pad(s, (0, feat - s.shape[0])) for s in bn_shifts]            # 5 betas
    vec_pack = jnp.stack(vecs).astype(jnp.float32)                             # (15, feat)
    b_last = b6.reshape(1, -1).astype(jnp.float32)                             # (1, dim)
    return w_first, w_mid, w_last, vec_pack, b_last


def _vmem_limit_bytes():
    """~3/4 of this generation's physical VMEM (v5e/v6e: 128 MiB -> 96 MiB,
    v7x: 64 MiB -> 48 MiB); conservative fallback if the query is unavailable."""
    try:
        cap = int(pltpu.get_tpu_info().vmem_capacity_bytes)
    except Exception:
        cap = 64 * 1024 * 1024
    return cap * 3 // 4


def ae_forward(x, params):
    """x: (B, dim) float32 -> (B, dim) float32."""
    w_first, w_mid, w_last, vec_pack, b_last = params
    B, dim = x.shape
    assert B >= 2, "training-mode BatchNorm needs batch size > 1"
    assert dim == w_first.shape[0] and dim == w_last.shape[1]
    vmem_limit = _vmem_limit_bytes()
    # Rough resident footprint: ~1.5 KiB / batch row (f32 + bf16 activations) + ~0.2 MiB weights.
    assert B * 1536 + (1 << 20) < vmem_limit, "batch too large for the whole-batch-resident kernel"
    # TODO(synk): for batches beyond the VMEM budget, restructure as a batch grid with two-pass
    # BN (stream batch tiles, accumulate per-feature sum/sumsq, then normalize) and shard the
    # batch axis across v7x's two TensorCores.
    vmem = pl.BlockSpec(memory_space=pltpu.MemorySpace.VMEM)
    return pl.pallas_call(
        _ae_kernel,
        out_shape=jax.ShapeDtypeStruct((B, dim), jnp.float32),
        in_specs=[vmem] * 6,
        out_specs=vmem,
        compiler_params=pltpu.CompilerParams(vmem_limit_bytes=vmem_limit),
    )(x.astype(jnp.float32), w_first, w_mid, w_last, vec_pack, b_last)


def init_ae_params(key, dim, hidden, bottleneck):
    """PyTorch-default-style init: Linear W/b ~ U(+-1/sqrt(fan_in)) (W stored as (in, out)
    for x @ W), BatchNorm gamma=1, beta=0."""
    dims = [(dim, hidden), (hidden, hidden), (hidden, bottleneck),   # encoder
            (bottleneck, hidden), (hidden, hidden), (hidden, dim)]   # decoder
    bn_sizes = [hidden, hidden, bottleneck, hidden, hidden]          # 5 BN layers
    keys = jax.random.split(key, 2 * len(dims))
    linears = []
    for li, (fan_in, fan_out) in enumerate(dims):
        bound = 1.0 / math.sqrt(fan_in)
        w = jax.random.uniform(keys[2 * li], (fan_in, fan_out),
                               minval=-bound, maxval=bound, dtype=jnp.float32)
        b = jax.random.uniform(keys[2 * li + 1], (fan_out,),
                               minval=-bound, maxval=bound, dtype=jnp.float32)
        linears.append((w, b))
    bn_scales = [jnp.ones((n,), jnp.float32) for n in bn_sizes]
    bn_shifts = [jnp.zeros((n,), jnp.float32) for n in bn_sizes]
    return linears, bn_scales, bn_shifts


def ae_reference(x, linears, bn_scales, bn_shifts):
    """Pure-JAX reference with the same numerics as the kernel (bf16 matmuls, f32 BN)."""
    h = x.astype(jnp.float32)
    for li, (w, b) in enumerate(linears):
        a = jnp.dot(h.astype(jnp.bfloat16), w.astype(jnp.bfloat16),
                    preferred_element_type=jnp.float32) + b
        if li == len(linears) - 1:
            return a
        mean = jnp.sum(a, axis=0, keepdims=True) / a.shape[0]
        c = a - mean
        var = jnp.sum(c * c, axis=0, keepdims=True) / a.shape[0]
        scale = bn_scales[li] * lax.rsqrt(var + BN_EPS)
        h = jnp.maximum(c * scale + bn_shifts[li], 0.0)
    return h


if __name__ == "__main__":
    # Small shapes consistent with the module: batch=8, dim=16, hidden=32, bottleneck=8.
    B, DIM, HIDDEN, BOTTLENECK = 8, 16, 32, 8
    key = jax.random.PRNGKey(0)
    k_x, k_p = jax.random.split(key)
    x = jax.random.normal(k_x, (B, DIM), dtype=jnp.float32)
    linears, bn_scales, bn_shifts = init_ae_params(k_p, DIM, HIDDEN, BOTTLENECK)
    params = pack_params(linears, bn_scales, bn_shifts)

    out = ae_forward(x, params)
    jax.block_until_ready(out)
    assert out.shape == (B, DIM) and out.dtype == jnp.float32
    assert bool(jnp.all(jnp.isfinite(out)))

    ref = ae_reference(x, linears, bn_scales, bn_shifts)
    assert bool(jnp.allclose(out, ref, rtol=1e-2, atol=1e-2)), float(jnp.max(jnp.abs(out - ref)))
    print("KERNEL_OK")
</pallas_src>

<mosaic_0001>
module attributes {stable_mosaic.version = 11 : i64} {
  func.func @_ae_kernel(%arg0: memref<8x16xf32, #tpu.memory_space<vmem>>, %arg1: memref<16x128xbf16, #tpu.memory_space<vmem>>, %arg2: memref<4x128x128xbf16, #tpu.memory_space<vmem>>, %arg3: memref<128x16xbf16, #tpu.memory_space<vmem>>, %arg4: memref<15x128xf32, #tpu.memory_space<vmem>>, %arg5: memref<1x16xf32, #tpu.memory_space<vmem>>, %arg6: memref<8x16xf32, #tpu.memory_space<vmem>>) attributes {dimension_semantics = [], scalar_prefetch = 0 : i64, scratch_operands = 0 : i64, tpu.core_type = #tpu.core_type<tc>} {
    %c0 = arith.constant 0 : index
    %c0_0 = arith.constant 0 : index
    %0 = vector.load %arg0[%c0, %c0_0] : memref<8x16xf32, #tpu.memory_space<vmem>>, vector<8x16xf32>
    %1 = arith.truncf %0 : vector<8x16xf32> to vector<8x16xbf16>
    %c0_1 = arith.constant 0 : index
    %c0_2 = arith.constant 0 : index
    %2 = vector.load %arg1[%c0_1, %c0_2] : memref<16x128xbf16, #tpu.memory_space<vmem>>, vector<16x128xbf16>
    %cst = arith.constant dense<0.000000e+00> : vector<8x128xf32>
    %3 = tpu.matmul %1, %2, %cst {dimension_numbers = #tpu.dot_dimension_numbers<[1], [0], [0], [1], [0, 0, 1, 1], [], []>} : vector<8x16xbf16>, vector<16x128xbf16>, vector<8x128xf32> -> vector<8x128xf32>
    %c0_3 = arith.constant 0 : index
    %c0_4 = arith.constant 0 : index
    %4 = vector.load %arg4[%c0_3, %c0_4] : memref<15x128xf32, #tpu.memory_space<vmem>>, vector<1x128xf32>
    %5 = vector.broadcast %4 : vector<1x128xf32> to vector<8x128xf32>
    %6 = arith.addf %3, %5 : vector<8x128xf32>
    %cst_5 = arith.constant dense<0.000000e+00> : vector<128xf32>
    %7 = vector.multi_reduction <add>, %6, %cst_5 [0] : vector<8x128xf32> to vector<128xf32>
    %8 = vector.shape_cast %7 : vector<128xf32> to vector<1x128xf32>
    %cst_6 = arith.constant 1.250000e-01 : f32
    %9 = vector.broadcast %cst_6 : f32 to vector<1x128xf32>
    %10 = arith.mulf %8, %9 : vector<1x128xf32>
    %11 = vector.broadcast %10 : vector<1x128xf32> to vector<8x128xf32>
    %12 = arith.subf %6, %11 : vector<8x128xf32>
    %13 = arith.mulf %12, %12 : vector<8x128xf32>
    %cst_7 = arith.constant dense<0.000000e+00> : vector<128xf32>
    %14 = vector.multi_reduction <add>, %13, %cst_7 [0] : vector<8x128xf32> to vector<128xf32>
    %15 = vector.shape_cast %14 : vector<128xf32> to vector<1x128xf32>
    %cst_8 = arith.constant 1.250000e-01 : f32
    %16 = vector.broadcast %cst_8 : f32 to vector<1x128xf32>
    %17 = arith.mulf %15, %16 : vector<1x128xf32>
    %c5 = arith.constant 5 : index
    %c0_9 = arith.constant 0 : index
    %18 = vector.load %arg4[%c5, %c0_9] : memref<15x128xf32, #tpu.memory_space<vmem>>, vector<1x128xf32>
    %c10 = arith.constant 10 : index
    %c0_10 = arith.constant 0 : index
    %19 = vector.load %arg4[%c10, %c0_10] : memref<15x128xf32, #tpu.memory_space<vmem>>, vector<1x128xf32>
    %cst_11 = arith.constant 9.99999974E-6 : f32
    %20 = vector.broadcast %cst_11 : f32 to vector<1x128xf32>
    %21 = arith.addf %17, %20 : vector<1x128xf32>
    %22 = math.rsqrt %21 : vector<1x128xf32>
    %23 = arith.mulf %18, %22 : vector<1x128xf32>
    %24 = vector.broadcast %23 : vector<1x128xf32> to vector<8x128xf32>
    %25 = arith.mulf %12, %24 : vector<8x128xf32>
    %26 = vector.broadcast %19 : vector<1x128xf32> to vector<8x128xf32>
    %27 = arith.addf %25, %26 : vector<8x128xf32>
    %cst_12 = arith.constant 0.000000e+00 : f32
    %28 = vector.broadcast %cst_12 : f32 to vector<8x128xf32>
    %29 = arith.maximumf %27, %28 : vector<8x128xf32>
    %30 = arith.truncf %29 : vector<8x128xf32> to vector<8x128xbf16>
    %c0_13 = arith.constant 0 : index
    %c0_14 = arith.constant 0 : index
    %c0_15 = arith.constant 0 : index
    %31 = vector.load %arg2[%c0_13, %c0_14, %c0_15] : memref<4x128x128xbf16, #tpu.memory_space<vmem>>, vector<1x128x128xbf16>
    %32 = vector.shape_cast %31 : vector<1x128x128xbf16> to vector<128x128xbf16>
    %cst_16 = arith.constant dense<0.000000e+00> : vector<8x128xf32>
    %33 = tpu.matmul %30, %32, %cst_16 {dimension_numbers = #tpu.dot_dimension_numbers<[1], [0], [0], [1], [0, 0, 1, 1], [], []>} : vector<8x128xbf16>, vector<128x128xbf16>, vector<8x128xf32> -> vector<8x128xf32>
    %c1 = arith.constant 1 : index
    %c0_17 = arith.constant 0 : index
    %34 = vector.load %arg4[%c1, %c0_17] : memref<15x128xf32, #tpu.memory_space<vmem>>, vector<1x128xf32>
    %35 = vector.broadcast %34 : vector<1x128xf32> to vector<8x128xf32>
    %36 = arith.addf %33, %35 : vector<8x128xf32>
    %cst_18 = arith.constant dense<0.000000e+00> : vector<128xf32>
    %37 = vector.multi_reduction <add>, %36, %cst_18 [0] : vector<8x128xf32> to vector<128xf32>
    %38 = vector.shape_cast %37 : vector<128xf32> to vector<1x128xf32>
    %cst_19 = arith.constant 1.250000e-01 : f32
    %39 = vector.broadcast %cst_19 : f32 to vector<1x128xf32>
    %40 = arith.mulf %38, %39 : vector<1x128xf32>
    %41 = vector.broadcast %40 : vector<1x128xf32> to vector<8x128xf32>
    %42 = arith.subf %36, %41 : vector<8x128xf32>
    %43 = arith.mulf %42, %42 : vector<8x128xf32>
    %cst_20 = arith.constant dense<0.000000e+00> : vector<128xf32>
    %44 = vector.multi_reduction <add>, %43, %cst_20 [0] : vector<8x128xf32> to vector<128xf32>
    %45 = vector.shape_cast %44 : vector<128xf32> to vector<1x128xf32>
    %cst_21 = arith.constant 1.250000e-01 : f32
    %46 = vector.broadcast %cst_21 : f32 to vector<1x128xf32>
    %47 = arith.mulf %45, %46 : vector<1x128xf32>
    %c6 = arith.constant 6 : index
    %c0_22 = arith.constant 0 : index
    %48 = vector.load %arg4[%c6, %c0_22] : memref<15x128xf32, #tpu.memory_space<vmem>>, vector<1x128xf32>
    %c11 = arith.constant 11 : index
    %c0_23 = arith.constant 0 : index
    %49 = vector.load %arg4[%c11, %c0_23] : memref<15x128xf32, #tpu.memory_space<vmem>>, vector<1x128xf32>
    %cst_24 = arith.constant 9.99999974E-6 : f32
    %50 = vector.broadcast %cst_24 : f32 to vector<1x128xf32>
    %51 = arith.addf %47, %50 : vector<1x128xf32>
    %52 = math.rsqrt %51 : vector<1x128xf32>
    %53 = arith.mulf %48, %52 : vector<1x128xf32>
    %54 = vector.broadcast %53 : vector<1x128xf32> to vector<8x128xf32>
    %55 = arith.mulf %42, %54 : vector<8x128xf32>
    %56 = vector.broadcast %49 : vector<1x128xf32> to vector<8x128xf32>
    %57 = arith.addf %55, %56 : vector<8x128xf32>
    %cst_25 = arith.constant 0.000000e+00 : f32
    %58 = vector.broadcast %cst_25 : f32 to vector<8x128xf32>
    %59 = arith.maximumf %57, %58 : vector<8x128xf32>
    %60 = arith.truncf %59 : vector<8x128xf32> to vector<8x128xbf16>
    %c1_26 = arith.constant 1 : index
    %c0_27 = arith.constant 0 : index
    %c0_28 = arith.constant 0 : index
    %61 = vector.load %arg2[%c1_26, %c0_27, %c0_28] : memref<4x128x128xbf16, #tpu.memory_space<vmem>>, vector<1x128x128xbf16>
    %62 = vector.shape_cast %61 : vector<1x128x128xbf16> to vector<128x128xbf16>
    %cst_29 = arith.constant dense<0.000000e+00> : vector<8x128xf32>
    %63 = tpu.matmul %60, %62, %cst_29 {dimension_numbers = #tpu.dot_dimension_numbers<[1], [0], [0], [1], [0, 0, 1, 1], [], []>} : vector<8x128xbf16>, vector<128x128xbf16>, vector<8x128xf32> -> vector<8x128xf32>
    %c2 = arith.constant 2 : index
    %c0_30 = arith.constant 0 : index
    %64 = vector.load %arg4[%c2, %c0_30] : memref<15x128xf32, #tpu.memory_space<vmem>>, vector<1x128xf32>
    %65 = vector.broadcast %64 : vector<1x128xf32> to vector<8x128xf32>
    %66 = arith.addf %63, %65 : vector<8x128xf32>
    %cst_31 = arith.constant dense<0.000000e+00> : vector<128xf32>
    %67 = vector.multi_reduction <add>, %66, %cst_31 [0] : vector<8x128xf32> to vector<128xf32>
    %68 = vector.shape_cast %67 : vector<128xf32> to vector<1x128xf32>
    %cst_32 = arith.constant 1.250000e-01 : f32
    %69 = vector.broadcast %cst_32 : f32 to vector<1x128xf32>
    %70 = arith.mulf %68, %69 : vector<1x128xf32>
    %71 = vector.broadcast %70 : vector<1x128xf32> to vector<8x128xf32>
    %72 = arith.subf %66, %71 : vector<8x128xf32>
    %73 = arith.mulf %72, %72 : vector<8x128xf32>
    %cst_33 = arith.constant dense<0.000000e+00> : vector<128xf32>
    %74 = vector.multi_reduction <add>, %73, %cst_33 [0] : vector<8x128xf32> to vector<128xf32>
    %75 = vector.shape_cast %74 : vector<128xf32> to vector<1x128xf32>
    %cst_34 = arith.constant 1.250000e-01 : f32
    %76 = vector.broadcast %cst_34 : f32 to vector<1x128xf32>
    %77 = arith.mulf %75, %76 : vector<1x128xf32>
    %c7 = arith.constant 7 : index
    %c0_35 = arith.constant 0 : index
    %78 = vector.load %arg4[%c7, %c0_35] : memref<15x128xf32, #tpu.memory_space<vmem>>, vector<1x128xf32>
    %c12 = arith.constant 12 : index
    %c0_36 = arith.constant 0 : index
    %79 = vector.load %arg4[%c12, %c0_36] : memref<15x128xf32, #tpu.memory_space<vmem>>, vector<1x128xf32>
    %cst_37 = arith.constant 9.99999974E-6 : f32
    %80 = vector.broadcast %cst_37 : f32 to vector<1x128xf32>
    %81 = arith.addf %77, %80 : vector<1x128xf32>
    %82 = math.rsqrt %81 : vector<1x128xf32>
    %83 = arith.mulf %78, %82 : vector<1x128xf32>
    %84 = vector.broadcast %83 : vector<1x128xf32> to vector<8x128xf32>
    %85 = arith.mulf %72, %84 : vector<8x128xf32>
    %86 = vector.broadcast %79 : vector<1x128xf32> to vector<8x128xf32>
    %87 = arith.addf %85, %86 : vector<8x128xf32>
    %cst_38 = arith.constant 0.000000e+00 : f32
    %88 = vector.broadcast %cst_38 : f32 to vector<8x128xf32>
    %89 = arith.maximumf %87, %88 : vector<8x128xf32>
    %90 = arith.truncf %89 : vector<8x128xf32> to vector<8x128xbf16>
    %c2_39 = arith.constant 2 : index
    %c0_40 = arith.constant 0 : index
    %c0_41 = arith.constant 0 : index
    %91 = vector.load %arg2[%c2_39, %c0_40, %c0_41] : memref<4x128x128xbf16, #tpu.memory_space<vmem>>, vector<1x128x128xbf16>
    %92 = vector.shape_cast %91 : vector<1x128x128xbf16> to vector<128x128xbf16>
    %cst_42 = arith.constant dense<0.000000e+00> : vector<8x128xf32>
    %93 = tpu.matmul %90, %92, %cst_42 {dimension_numbers = #tpu.dot_dimension_numbers<[1], [0], [0], [1], [0, 0, 1, 1], [], []>} : vector<8x128xbf16>, vector<128x128xbf16>, vector<8x128xf32> -> vector<8x128xf32>
    %c3 = arith.constant 3 : index
    %c0_43 = arith.constant 0 : index
    %94 = vector.load %arg4[%c3, %c0_43] : memref<15x128xf32, #tpu.memory_space<vmem>>, vector<1x128xf32>
    %95 = vector.broadcast %94 : vector<1x128xf32> to vector<8x128xf32>
    %96 = arith.addf %93, %95 : vector<8x128xf32>
    %cst_44 = arith.constant dense<0.000000e+00> : vector<128xf32>
    %97 = vector.multi_reduction <add>, %96, %cst_44 [0] : vector<8x128xf32> to vector<128xf32>
    %98 = vector.shape_cast %97 : vector<128xf32> to vector<1x128xf32>
    %cst_45 = arith.constant 1.250000e-01 : f32
    %99 = vector.broadcast %cst_45 : f32 to vector<1x128xf32>
    %100 = arith.mulf %98, %99 : vector<1x128xf32>
    %101 = vector.broadcast %100 : vector<1x128xf32> to vector<8x128xf32>
    %102 = arith.subf %96, %101 : vector<8x128xf32>
    %103 = arith.mulf %102, %102 : vector<8x128xf32>
    %cst_46 = arith.constant dense<0.000000e+00> : vector<128xf32>
    %104 = vector.multi_reduction <add>, %103, %cst_46 [0] : vector<8x128xf32> to vector<128xf32>
    %105 = vector.shape_cast %104 : vector<128xf32> to vector<1x128xf32>
    %cst_47 = arith.constant 1.250000e-01 : f32
    %106 = vector.broadcast %cst_47 : f32 to vector<1x128xf32>
    %107 = arith.mulf %105, %106 : vector<1x128xf32>
    %c8 = arith.constant 8 : index
    %c0_48 = arith.constant 0 : index
    %108 = vector.load %arg4[%c8, %c0_48] : memref<15x128xf32, #tpu.memory_space<vmem>>, vector<1x128xf32>
    %c13 = arith.constant 13 : index
    %c0_49 = arith.constant 0 : index
    %109 = vector.load %arg4[%c13, %c0_49] : memref<15x128xf32, #tpu.memory_space<vmem>>, vector<1x128xf32>
    %cst_50 = arith.constant 9.99999974E-6 : f32
    %110 = vector.broadcast %cst_50 : f32 to vector<1x128xf32>
    %111 = arith.addf %107, %110 : vector<1x128xf32>
    %112 = math.rsqrt %111 : vector<1x128xf32>
    %113 = arith.mulf %108, %112 : vector<1x128xf32>
    %114 = vector.broadcast %113 : vector<1x128xf32> to vector<8x128xf32>
    %115 = arith.mulf %102, %114 : vector<8x128xf32>
    %116 = vector.broadcast %109 : vector<1x128xf32> to vector<8x128xf32>
    %117 = arith.addf %115, %116 : vector<8x128xf32>
    %cst_51 = arith.constant 0.000000e+00 : f32
    %118 = vector.broadcast %cst_51 : f32 to vector<8x128xf32>
    %119 = arith.maximumf %117, %118 : vector<8x128xf32>
    %120 = arith.truncf %119 : vector<8x128xf32> to vector<8x128xbf16>
    %c3_52 = arith.constant 3 : index
    %c0_53 = arith.constant 0 : index
    %c0_54 = arith.constant 0 : index
    %121 = vector.load %arg2[%c3_52, %c0_53, %c0_54] : memref<4x128x128xbf16, #tpu.memory_space<vmem>>, vector<1x128x128xbf16>
    %122 = vector.shape_cast %121 : vector<1x128x128xbf16> to vector<128x128xbf16>
    %cst_55 = arith.constant dense<0.000000e+00> : vector<8x128xf32>
    %123 = tpu.matmul %120, %122, %cst_55 {dimension_numbers = #tpu.dot_dimension_numbers<[1], [0], [0], [1], [0, 0, 1, 1], [], []>} : vector<8x128xbf16>, vector<128x128xbf16>, vector<8x128xf32> -> vector<8x128xf32>
    %c4 = arith.constant 4 : index
    %c0_56 = arith.constant 0 : index
    %124 = vector.load %arg4[%c4, %c0_56] : memref<15x128xf32, #tpu.memory_space<vmem>>, vector<1x128xf32>
    %125 = vector.broadcast %124 : vector<1x128xf32> to vector<8x128xf32>
    %126 = arith.addf %123, %125 : vector<8x128xf32>
    %cst_57 = arith.constant dense<0.000000e+00> : vector<128xf32>
    %127 = vector.multi_reduction <add>, %126, %cst_57 [0] : vector<8x128xf32> to vector<128xf32>
    %128 = vector.shape_cast %127 : vector<128xf32> to vector<1x128xf32>
    %cst_58 = arith.constant 1.250000e-01 : f32
    %129 = vector.broadcast %cst_58 : f32 to vector<1x128xf32>
    %130 = arith.mulf %128, %129 : vector<1x128xf32>
    %131 = vector.broadcast %130 : vector<1x128xf32> to vector<8x128xf32>
    %132 = arith.subf %126, %131 : vector<8x128xf32>
    %133 = arith.mulf %132, %132 : vector<8x128xf32>
    %cst_59 = arith.constant dense<0.000000e+00> : vector<128xf32>
    %134 = vector.multi_reduction <add>, %133, %cst_59 [0] : vector<8x128xf32> to vector<128xf32>
    %135 = vector.shape_cast %134 : vector<128xf32> to vector<1x128xf32>
    %cst_60 = arith.constant 1.250000e-01 : f32
    %136 = vector.broadcast %cst_60 : f32 to vector<1x128xf32>
    %137 = arith.mulf %135, %136 : vector<1x128xf32>
    %c9 = arith.constant 9 : index
    %c0_61 = arith.constant 0 : index
    %138 = vector.load %arg4[%c9, %c0_61] : memref<15x128xf32, #tpu.memory_space<vmem>>, vector<1x128xf32>
    %c14 = arith.constant 14 : index
    %c0_62 = arith.constant 0 : index
    %139 = vector.load %arg4[%c14, %c0_62] : memref<15x128xf32, #tpu.memory_space<vmem>>, vector<1x128xf32>
    %cst_63 = arith.constant 9.99999974E-6 : f32
    %140 = vector.broadcast %cst_63 : f32 to vector<1x128xf32>
    %141 = arith.addf %137, %140 : vector<1x128xf32>
    %142 = math.rsqrt %141 : vector<1x128xf32>
    %143 = arith.mulf %138, %142 : vector<1x128xf32>
    %144 = vector.broadcast %143 : vector<1x128xf32> to vector<8x128xf32>
    %145 = arith.mulf %132, %144 : vector<8x128xf32>
    %146 = vector.broadcast %139 : vector<1x128xf32> to vector<8x128xf32>
    %147 = arith.addf %145, %146 : vector<8x128xf32>
    %cst_64 = arith.constant 0.000000e+00 : f32
    %148 = vector.broadcast %cst_64 : f32 to vector<8x128xf32>
    %149 = arith.maximumf %147, %148 : vector<8x128xf32>
    %150 = arith.truncf %149 : vector<8x128xf32> to vector<8x128xbf16>
    %c0_65 = arith.constant 0 : index
    %c0_66 = arith.constant 0 : index
    %151 = vector.load %arg3[%c0_65, %c0_66] : memref<128x16xbf16, #tpu.memory_space<vmem>>, vector<128x16xbf16>
    %cst_67 = arith.constant dense<0.000000e+00> : vector<8x16xf32>
    %152 = tpu.matmul %150, %151, %cst_67 {dimension_numbers = #tpu.dot_dimension_numbers<[1], [0], [0], [1], [0, 0, 1, 1], [], []>} : vector<8x128xbf16>, vector<128x16xbf16>, vector<8x16xf32> -> vector<8x16xf32>
    %c0_68 = arith.constant 0 : index
    %c0_69 = arith.constant 0 : index
    %153 = vector.load %arg5[%c0_68, %c0_69] : memref<1x16xf32, #tpu.memory_space<vmem>>, vector<1x16xf32>
    %154 = vector.broadcast %153 : vector<1x16xf32> to vector<8x16xf32>
    %155 = arith.addf %152, %154 : vector<8x16xf32>
    %c0_70 = arith.constant 0 : index
    %c0_71 = arith.constant 0 : index
    %156 = vector.load %arg6[%c0_70, %c0_71] : memref<8x16xf32, #tpu.memory_space<vmem>>, vector<8x16xf32>
    tpu.vector_store %arg6[%c0_70, %c0_71], %155 {strides = array<i32>} : memref<8x16xf32, #tpu.memory_space<vmem>>, vector<8x16xf32>,
    return
  }
}

</mosaic_0001>

<llo_original>
// kernel: tpu_custom_call.1
$region0: #{tpu_custom_call.1}
  #allocation0 [shape = 'u32[]', space=smem, size = 0x4, offset = 0x4, fixed_abs, tag = 'smem constant byte address 0x4 - core index']
  #allocation1 [shape = 'u32[72,128]{1,0:T(1,128)}', space=vmem, size = 0x9000, scoped, tag = 'internal scratch']
  %s0 = inlined_call_operand.vmem [shape: f32[8,16], index: 0, kind: input, shape index: {}]
  %s1 = inlined_call_operand.vmem [shape: bf16[16,128], index: 1, kind: input, shape index: {}]
  %s2 = inlined_call_operand.hbm [shape: bf16[4,128,128], index: 2, kind: input, shape index: {}]
  %s3 = inlined_call_operand.vmem [shape: bf16[128,16], index: 3, kind: input, shape index: {}]
  %s4 = inlined_call_operand.vmem [shape: f32[15,128], index: 4, kind: input, shape index: {}]
  %s5 = inlined_call_operand.vmem [shape: f32[1,16], index: 5, kind: input, shape index: {}]
  %s6 = inlined_call_operand.hbm [shape: f32[8,16], index: 6, kind: output, shape index: {}]
  %s7 = sld [smem:[#allocation0]]
  $region38: #{tpu_custom_call.1} parent=0
    _
  %s9 = ssub.s32 1, %s7
  %s10 = scalar_select 0, %s9, %s7
  $region1: #{tpu_custom_call.1} parent=0
    #allocation2 [shape = 'u8[131072]{0}', space=vmem, size = 0x20000, scoped, tag = 'input window, operand 2, single buffered']
    #allocation3 [shape = 's32[1]{0}', space=sflag, size = 0x4, scoped, tag = 'scoped memory for tpu_custom_call.1']
    #allocation4 [shape = 's32[1]{0}', space=sflag, size = 0x4, scoped, tag = 'scoped memory for tpu_custom_call.1']
    #allocation5 [shape = 'u8[4096]{0}', space=vmem, size = 0x1000, scoped, tag = 'output window, operand 0, single buffered']
    %11 = vsyncpa [#allocation3], 0
    %12 = vsyncpa [#allocation4], 0
    // Predicated region
    $region2: #{tpu_custom_call.1} parent=1 // pred_check
      _
    $region3: #{tpu_custom_call.1} parent=1 // pred_check_branch
      %14 = sbr.rel (0) target = $region5
    $region4: #{tpu_custom_call.1} parent=1 // pred_region
      _
    $region5: #{tpu_custom_call.1} parent=1 // pred_fallthru
      _
    // Predicated region
    $region6: #{tpu_custom_call.1} parent=1 // pred_check
      _
    $region7: #{tpu_custom_call.1} parent=1 // pred_check_branch
      %16 = sbr.rel (0) target = $region9
    $region8: #{tpu_custom_call.1} parent=1 // pred_region
      _
    $region9: #{tpu_custom_call.1} parent=1 // pred_fallthru
      _
    // Predicated region
    $region10: #{tpu_custom_call.1} parent=1 // pred_check
      _
    $region11: #{tpu_custom_call.1} parent=1 // pred_check_branch
      %18 = sbr.rel (0) target = $region13
    $region12: #{tpu_custom_call.1} parent=1 // pred_region
      %20 = vsyncadd [#allocation3], 0
      %s21 = sshll.u32 %s2, 4
      %s22 = int_to_ptr.hbm [resolvable:$true] %s21
      %s23 = sshll.u32 [#allocation2], 4
      %s24 = int_to_ptr.vmem [resolvable:$true] %s23
      %29 = dma.hbm_to_vmem [thread:$0]  %s22, 4096, %s24, [#allocation3], 64, 64, 4
    $region13: #{tpu_custom_call.1} parent=1 // pred_fallthru
      _
    // Predicated region
    $region14: #{tpu_custom_call.1} parent=1 // pred_check
      _
    $region15: #{tpu_custom_call.1} parent=1 // pred_check_branch
      %31 = sbr.rel (0) target = $region17
    $region16: #{tpu_custom_call.1} parent=1 // pred_region
      _
    $region17: #{tpu_custom_call.1} parent=1 // pred_fallthru
      _
    // Predicated region
    $region18: #{tpu_custom_call.1} parent=1 // pred_check
      _
    $region19: #{tpu_custom_call.1} parent=1 // pred_check_branch
      %33 = sbr.rel (0) target = $region21
    $region20: #{tpu_custom_call.1} parent=1 // pred_region
      _
    $region21: #{tpu_custom_call.1} parent=1 // pred_fallthru
      _
    // Predicated region
    $region22: #{tpu_custom_call.1} parent=1 // pred_check
      _
    $region23: #{tpu_custom_call.1} parent=1 // pred_check_branch
      %35 = sbr.rel (0) target = $region25
    $region24: #{tpu_custom_call.1} parent=1 // pred_region
      _
    $region25: #{tpu_custom_call.1} parent=1 // pred_fallthru
      _
    // Predicated region
    $region26: #{tpu_custom_call.1} parent=1 // pred_check
      _
    $region27: #{tpu_custom_call.1} parent=1 // pred_check_branch
      %37 = sbr.rel (0) target = $region29
    $region28: #{tpu_custom_call.1} parent=1 // pred_region
      %39 = dma.done [#allocation3], 4096
    $region29: #{tpu_custom_call.1} parent=1 // pred_fallthru
      _
    %v41 = vld [vmem:[%s0] sm:$0xff]
    %v42 = vpack.c.bf16 %v41, %v41
    %v43 = vld [vmem:[%s1] sm:$0xf]
    %v44 = vld [vmem:[%s1 + $0x4] sm:$0xf]
    %v45 = vld [vmem:[%s4] sm:$0x1]
    %v46 = vperm.slane %v45, 0
    %v49 = vunpack.c.l.b16 %v43
    %v50 = vunpack.c.l.b16 %v44
    %v51 = vpack.c.b16 %v50, %v49
    %vm53 = vcmask 130048
    %v55 = vsel %vm53, %v42, 0
    %57 = vmatpush.bf16.msra.mxu0 0
    %58 = vmatpush.bf16.msra.mxu0 0
    %59 = vmatpush.bf16.msra.mxu0 0
    %60 = vmatpush.bf16.msra.mxu0 0
    %61 = vmatpush.bf16.msra.mxu0 0
    %62 = vmatpush.bf16.msra.mxu0 0
    %63 = vmatpush.bf16.msra.mxu0 0
    %64 = vmatpush.bf16.msra.mxu0 %v51
    %65 = vmatmul.bf16.gmra.mxu0 %v55
    %v66 = vpop.f32.mrf.mxu0
    %v67 = vadd.f32 %v46, %v66
    %v68 = vpop.f32.mrf.mxu0
    %69 = vdwg.mxu0
    %v70 = vrot.slane %v67, 4
    %v71 = vadd.f32 %v67, %v70
    %v72 = vrot.slane %v71, 2
    %v73 = vadd.f32 %v71, %v72
    %v74 = vrot.slane %v73, 1
    %v75 = vadd.f32 %v73, %v74
    %v76 = vmul.f32 %v75, 0.125
    %v77 = vsub.f32 %v67, %v76
    %v78 = vmul.f32 %v77, %v77
    %v79 = vrot.slane %v78, 4
    %v80 = vadd.f32 %v78, %v79
    %v81 = vrot.slane %v80, 2
    %v82 = vadd.f32 %v80, %v81
    %v83 = vrot.slane %v82, 1
    %v84 = vadd.f32 %v82, %v83
    %v85 = vmul.f32 %v84, 0.125
    %v86 = vld [vmem:[%s4 + $0x5] sm:$0x1]
    %v87 = vld [vmem:[%s4 + $0xa] sm:$0x1]
    %v88 = vadd.f32 %v85, 1e-05
    %v89 = vrsqrt.pop %v88
    %v90 = vmul.f32 %v89, %v88
    %v91 = vmul.f32 %v90, %v89
    %v92 = vmul.f32 0.5, %v91
    %v93 = vsub.f32 1.5, %v92
    %v94 = vmul.f32 %v89, %v93
    %vm95 = vweird.f32 %v88
    %vm96 = vweird.f32 %v89
    %vm97 = vmor %vm95, %vm96
    %v98 = vsel %vm97, %v89, %v94
    %v99 = vmul.f32 %v86, %v98
    %v100 = vperm.slane %v99, 0
    %v101 = vmul.f32 %v77, %v100
    %v102 = vperm.slane %v87, 0
    %v103 = vadd.f32 %v101, %v102
    %v104 = vmax.f32 %v103, 0.0
    %v105 = vpack.c.bf16 %v104, %v104
    %v106 = vld [vmem:[#allocation2] sm:$0xf]
    %v107 = vld [vmem:[#allocation2 + $0x4] sm:$0xf]
    %v108 = vld [vmem:[#allocation2 + $0x8] sm:$0xf]
    %v109 = vld [vmem:[#allocation2 + $0xc] sm:$0xf]
    %v110 = vld [vmem:[#allocation2 + $0x10] sm:$0xf]
    %v111 = vld [vmem:[#allocation2 + $0x14] sm:$0xf]
    %v112 = vld [vmem:[#allocation2 + $0x18] sm:$0xf]
    %v113 = vld [vmem:[#allocation2 + $0x1c] sm:$0xf]
    %v114 = vld [vmem:[#allocation2 + $0x20] sm:$0xf]
    %v115 = vld [vmem:[#allocation2 + $0x24] sm:$0xf]
    %v116 = vld [vmem:[#allocation2 + $0x28] sm:$0xf]
    %v117 = vld [vmem:[#allocation2 + $0x2c] sm:$0xf]
    %v118 = vld [vmem:[#allocation2 + $0x30] sm:$0xf]
    %v119 = vld [vmem:[#allocation2 + $0x34] sm:$0xf]
    %v120 = vld [vmem:[#allocation2 + $0x38] sm:$0xf]
    %v121 = vld [vmem:[#allocation2 + $0x3c] sm:$0xf]
    %v122 = vld [vmem:[%s4 + $0x1] sm:$0x1]
    %v123 = vperm.slane %v122, 0
    %v140 = vunpack.c.l.b16 %v106
    %v141 = vunpack.c.l.b16 %v107
    %v142 = vunpack.c.l.b16 %v108
    %v143 = vunpack.c.l.b16 %v109
    %v144 = vunpack.c.l.b16 %v110
    %v145 = vunpack.c.l.b16 %v111
    %v146 = vunpack.c.l.b16 %v112
    %v147 = vunpack.c.l.b16 %v113
    %v148 = vunpack.c.l.b16 %v114
    %v149 = vunpack.c.l.b16 %v115
    %v150 = vunpack.c.l.b16 %v116
    %v151 = vunpack.c.l.b16 %v117
    %v152 = vunpack.c.l.b16 %v118
    %v153 = vunpack.c.l.b16 %v119
    %v154 = vunpack.c.l.b16 %v120
    %v155 = vunpack.c.l.b16 %v121
    %v156 = vpack.c.b16 %v141, %v140
    %v157 = vpack.c.b16 %v143, %v142
    %v158 = vpack.c.b16 %v145, %v144
    %v159 = vpack.c.b16 %v147, %v146
    %v160 = vpack.c.b16 %v149, %v148
    %v161 = vpack.c.b16 %v151, %v150
    %v162 = vpack.c.b16 %v153, %v152
    %v163 = vpack.c.b16 %v155, %v154
    %172 = vmatpush.bf16.msra.mxu0 %v163
    %173 = vmatpush.bf16.msra.mxu0 %v162
    %174 = vmatpush.bf16.msra.mxu0 %v161
    %175 = vmatpush.bf16.msra.mxu0 %v160
    %176 = vmatpush.bf16.msra.mxu0 %v159
    %177 = vmatpush.bf16.msra.mxu0 %v158
    %178 = vmatpush.bf16.msra.mxu0 %v157
    %179 = vmatpush.bf16.msra.mxu0 %v156
    %180 = vmatmul.bf16.gmra.mxu0 %v105
    %v181 = vpop.f32.mrf.mxu0
    %v182 = vadd.f32 %v123, %v181
    %v183 = vpop.f32.mrf.mxu0
    %184 = vdwg.mxu0
    %v185 = vrot.slane %v182, 4
    %v186 = vadd.f32 %v182, %v185
    %v187 = vrot.slane %v186, 2
    %v188 = vadd.f32 %v186, %v187
    %v189 = vrot.slane %v188, 1
    %v190 = vadd.f32 %v188, %v189
    %v191 = vmul.f32 %v190, 0.125
    %v192 = vsub.f32 %v182, %v191
    %v193 = vmul.f32 %v192, %v192
    %v194 = vrot.slane %v193, 4
    %v195 = vadd.f32 %v193, %v194
    %v196 = vrot.slane %v195, 2
    %v197 = vadd.f32 %v195, %v196
    %v198 = vrot.slane %v197, 1
    %v199 = vadd.f32 %v197, %v198
    %v200 = vmul.f32 %v199, 0.125
    %v201 = vld [vmem:[%s4 + $0x6] sm:$0x1]
    %v202 = vld [vmem:[%s4 + $0xb] sm:$0x1]
    %v203 = vadd.f32 %v200, 1e-05
    %v204 = vrsqrt.pop %v203
    %v205 = vmul.f32 %v204, %v203
    %v206 = vmul.f32 %v205, %v204
    %v207 = vmul.f32 0.5, %v206
    %v208 = vsub.f32 1.5, %v207
    %v209 = vmul.f32 %v204, %v208
    %vm210 = vweird.f32 %v203
    %vm211 = vweird.f32 %v204
    %vm212 = vmor %vm210, %vm211
    %v213 = vsel %vm212, %v204, %v209
    %v214 = vmul.f32 %v201, %v213
    %v215 = vperm.slane %v214, 0
    %v216 = vmul.f32 %v192, %v215
    %v217 = vperm.slane %v202, 0
    %v218 = vadd.f32 %v216, %v217
    %v219 = vmax.f32 %v218, 0.0
    %v220 = vpack.c.bf16 %v219, %v219
    %s221 = scalar_lea.vmem [#allocation2], 64
    %v222 = vld [vmem:[%s221] sm:$0xf]
    %v223 = vld [vmem:[%s221 + $0x4] sm:$0xf]
    %v224 = vld [vmem:[%s221 + $0x8] sm:$0xf]
    %v225 = vld [vmem:[%s221 + $0xc] sm:$0xf]
    %v226 = vld [vmem:[%s221 + $0x10] sm:$0xf]
    %v227 = vld [vmem:[%s221 + $0x14] sm:$0xf]
    %v228 = vld [vmem:[%s221 + $0x18] sm:$0xf]
    %v229 = vld [vmem:[%s221 + $0x1c] sm:$0xf]
    %v230 = vld [vmem:[%s221 + $0x20] sm:$0xf]
    %v231 = vld [vmem:[%s221 + $0x24] sm:$0xf]
    %v232 = vld [vmem:[%s221 + $0x28] sm:$0xf]
    %v233 = vld [vmem:[%s221 + $0x2c] sm:$0xf]
    %v234 = vld [vmem:[%s221 + $0x30] sm:$0xf]
    %v235 = vld [vmem:[%s221 + $0x34] sm:$0xf]
    %v236 = vld [vmem:[%s221 + $0x38] sm:$0xf]
    %v237 = vld [vmem:[%s221 + $0x3c] sm:$0xf]
    %v238 = vld [vmem:[%s4 + $0x2] sm:$0x1]
    %v239 = vperm.slane %v238, 0
    %v256 = vunpack.c.l.b16 %v222
    %v257 = vunpack.c.l.b16 %v223
    %v258 = vunpack.c.l.b16 %v224
    %v259 = vunpack.c.l.b16 %v225
    %v260 = vunpack.c.l.b16 %v226
    %v261 = vunpack.c.l.b16 %v227
    %v262 = vunpack.c.l.b16 %v228
    %v263 = vunpack.c.l.b16 %v229
    %v264 = vunpack.c.l.b16 %v230
    %v265 = vunpack.c.l.b16 %v231
    %v266 = vunpack.c.l.b16 %v232
    %v267 = vunpack.c.l.b16 %v233
    %v268 = vunpack.c.l.b16 %v234
    %v269 = vunpack.c.l.b16 %v235
    %v270 = vunpack.c.l.b16 %v236
    %v271 = vunpack.c.l.b16 %v237
    %v272 = vpack.c.b16 %v257, %v256
    %v273 = vpack.c.b16 %v259, %v258
    %v274 = vpack.c.b16 %v261, %v260
    %v275 = vpack.c.b16 %v263, %v262
    %v276 = vpack.c.b16 %v265, %v264
    %v277 = vpack.c.b16 %v267, %v266
    %v278 = vpack.c.b16 %v269, %v268
    %v279 = vpack.c.b16 %v271, %v270
    %288 = vmatpush.bf16.msra.mxu0 %v279
    %289 = vmatpush.bf16.msra.mxu0 %v278
    %290 = vmatpush.bf16.msra.mxu0 %v277
    %291 = vmatpush.bf16.msra.mxu0 %v276
    %292 = vmatpush.bf16.msra.mxu0 %v275
    %293 = vmatpush.bf16.msra.mxu0 %v274
    %294 = vmatpush.bf16.msra.mxu0 %v273
    %295 = vmatpush.bf16.msra.mxu0 %v272
    %296 = vmatmul.bf16.gmra.mxu0 %v220
    %v297 = vpop.f32.mrf.mxu0
    %v298 = vadd.f32 %v239, %v297
    %v299 = vpop.f32.mrf.mxu0
    %300 = vdwg.mxu0
    %v301 = vrot.slane %v298, 4
    %v302 = vadd.f32 %v298, %v301
    %v303 = vrot.slane %v302, 2
    %v304 = vadd.f32 %v302, %v303
    %v305 = vrot.slane %v304, 1
    %v306 = vadd.f32 %v304, %v305
    %v307 = vmul.f32 %v306, 0.125
    %v308 = vsub.f32 %v298, %v307
    %v309 = vmul.f32 %v308, %v308
    %v310 = vrot.slane %v309, 4
    %v311 = vadd.f32 %v309, %v310
    %v312 = vrot.slane %v311, 2
    %v313 = vadd.f32 %v311, %v312
    %v314 = vrot.slane %v313, 1
    %v315 = vadd.f32 %v313, %v314
    %v316 = vmul.f32 %v315, 0.125
    %v317 = vld [vmem:[%s4 + $0x7] sm:$0x1]
    %v318 = vld [vmem:[%s4 + $0xc] sm:$0x1]
    %v319 = vadd.f32 %v316, 1e-05
    %v320 = vrsqrt.pop %v319
    %v321 = vmul.f32 %v320, %v319
    %v322 = vmul.f32 %v321, %v320
    %v323 = vmul.f32 0.5, %v322
    %v324 = vsub.f32 1.5, %v323
    %v325 = vmul.f32 %v320, %v324
    %vm326 = vweird.f32 %v319
    %vm327 = vweird.f32 %v320
    %vm328 = vmor %vm326, %vm327
    %v329 = vsel %vm328, %v320, %v325
    %v330 = vmul.f32 %v317, %v329
    %v331 = vperm.slane %v330, 0
    %v332 = vmul.f32 %v308, %v331
    %v333 = vperm.slane %v318, 0
    %v334 = vadd.f32 %v332, %v333
    %v335 = vmax.f32 %v334, 0.0
    %v336 = vpack.c.bf16 %v335, %v335
    %s337 = scalar_lea.vmem [#allocation2], 128
    %v338 = vld [vmem:[%s337] sm:$0xf]
    %v339 = vld [vmem:[%s337 + $0x4] sm:$0xf]
    %v340 = vld [vmem:[%s337 + $0x8] sm:$0xf]
    %v341 = vld [vmem:[%s337 + $0xc] sm:$0xf]
    %v342 = vld [vmem:[%s337 + $0x10] sm:$0xf]
    %v343 = vld [vmem:[%s337 + $0x14] sm:$0xf]
    %v344 = vld [vmem:[%s337 + $0x18] sm:$0xf]
    %v345 = vld [vmem:[%s337 + $0x1c] sm:$0xf]
    %v346 = vld [vmem:[%s337 + $0x20] sm:$0xf]
    %v347 = vld [vmem:[%s337 + $0x24] sm:$0xf]
    %v348 = vld [vmem:[%s337 + $0x28] sm:$0xf]
    %v349 = vld [vmem:[%s337 + $0x2c] sm:$0xf]
    %v350 = vld [vmem:[%s337 + $0x30] sm:$0xf]
    %v351 = vld [vmem:[%s337 + $0x34] sm:$0xf]
    %v352 = vld [vmem:[%s337 + $0x38] sm:$0xf]
    %v353 = vld [vmem:[%s337 + $0x3c] sm:$0xf]
    %v354 = vld [vmem:[%s4 + $0x3] sm:$0x1]
    %v355 = vperm.slane %v354, 0
    %v372 = vunpack.c.l.b16 %v338
    %v373 = vunpack.c.l.b16 %v339
    %v374 = vunpack.c.l.b16 %v340
    %v375 = vunpack.c.l.b16 %v341
    %v376 = vunpack.c.l.b16 %v342
    %v377 = vunpack.c.l.b16 %v343
    %v378 = vunpack.c.l.b16 %v344
    %v379 = vunpack.c.l.b16 %v345
    %v380 = vunpack.c.l.b16 %v346
    %v381 = vunpack.c.l.b16 %v347
    %v382 = vunpack.c.l.b16 %v348
    %v383 = vunpack.c.l.b16 %v349
    %v384 = vunpack.c.l.b16 %v350
    %v385 = vunpack.c.l.b16 %v351
    %v386 = vunpack.c.l.b16 %v352
    %v387 = vunpack.c.l.b16 %v353
    %v388 = vpack.c.b16 %v373, %v372
    %v389 = vpack.c.b16 %v375, %v374
    %v390 = vpack.c.b16 %v377, %v376
    %v391 = vpack.c.b16 %v379, %v378
    %v392 = vpack.c.b16 %v381, %v380
    %v393 = vpack.c.b16 %v383, %v382
    %v394 = vpack.c.b16 %v385, %v384
    %v395 = vpack.c.b16 %v387, %v386
    %404 = vmatpush.bf16.msra.mxu0 %v395
    %405 = vmatpush.bf16.msra.mxu0 %v394
    %406 = vmatpush.bf16.msra.mxu0 %v393
    %407 = vmatpush.bf16.msra.mxu0 %v392
    %408 = vmatpush.bf16.msra.mxu0 %v391
    %409 = vmatpush.bf16.msra.mxu0 %v390
    %410 = vmatpush.bf16.msra.mxu0 %v389
    %411 = vmatpush.bf16.msra.mxu0 %v388
    %412 = vmatmul.bf16.gmra.mxu0 %v336
    %v413 = vpop.f32.mrf.mxu0
    %v414 = vadd.f32 %v355, %v413
    %v415 = vpop.f32.mrf.mxu0
    %416 = vdwg.mxu0
    %v417 = vrot.slane %v414, 4
    %v418 = vadd.f32 %v414, %v417
    %v419 = vrot.slane %v418, 2
    %v420 = vadd.f32 %v418, %v419
    %v421 = vrot.slane %v420, 1
    %v422 = vadd.f32 %v420, %v421
    %v423 = vmul.f32 %v422, 0.125
    %v424 = vsub.f32 %v414, %v423
    %v425 = vmul.f32 %v424, %v424
    %v426 = vrot.slane %v425, 4
    %v427 = vadd.f32 %v425, %v426
    %v428 = vrot.slane %v427, 2
    %v429 = vadd.f32 %v427, %v428
    %v430 = vrot.slane %v429, 1
    %v431 = vadd.f32 %v429, %v430
    %v432 = vmul.f32 %v431, 0.125
    %v433 = vld [vmem:[%s4 + $0x8] sm:$0x1]
    %v434 = vld [vmem:[%s4 + $0xd] sm:$0x1]
    %v435 = vadd.f32 %v432, 1e-05
    %v436 = vrsqrt.pop %v435
    %v437 = vmul.f32 %v436, %v435
    %v438 = vmul.f32 %v437, %v436
    %v439 = vmul.f32 0.5, %v438
    %v440 = vsub.f32 1.5, %v439
    %v441 = vmul.f32 %v436, %v440
    %vm442 = vweird.f32 %v435
    %vm443 = vweird.f32 %v436
    %vm444 = vmor %vm442, %vm443
    %v445 = vsel %vm444, %v436, %v441
    %v446 = vmul.f32 %v433, %v445
    %v447 = vperm.slane %v446, 0
    %v448 = vmul.f32 %v424, %v447
    %v449 = vperm.slane %v434, 0
    %v450 = vadd.f32 %v448, %v449
    %v451 = vmax.f32 %v450, 0.0
    %v452 = vpack.c.bf16 %v451, %v451
    %s453 = scalar_lea.vmem [#allocation2], 192
    %v454 = vld [vmem:[%s453] sm:$0xf]
    %v455 = vld [vmem:[%s453 + $0x4] sm:$0xf]
    %v456 = vld [vmem:[%s453 + $0x8] sm:$0xf]
    %v457 = vld [vmem:[%s453 + $0xc] sm:$0xf]
    %v458 = vld [vmem:[%s453 + $0x10] sm:$0xf]
    %v459 = vld [vmem:[%s453 + $0x14] sm:$0xf]
    %v460 = vld [vmem:[%s453 + $0x18] sm:$0xf]
    %v461 = vld [vmem:[%s453 + $0x1c] sm:$0xf]
    %v462 = vld [vmem:[%s453 + $0x20] sm:$0xf]
    %v463 = vld [vmem:[%s453 + $0x24] sm:$0xf]
    %v464 = vld [vmem:[%s453 + $0x28] sm:$0xf]
    %v465 = vld [vmem:[%s453 + $0x2c] sm:$0xf]
    %v466 = vld [vmem:[%s453 + $0x30] sm:$0xf]
    %v467 = vld [vmem:[%s453 + $0x34] sm:$0xf]
    %v468 = vld [vmem:[%s453 + $0x38] sm:$0xf]
    %v469 = vld [vmem:[%s453 + $0x3c] sm:$0xf]
    %v470 = vld [vmem:[%s4 + $0x4] sm:$0x1]
    %v471 = vperm.slane %v470, 0
    %v488 = vunpack.c.l.b16 %v454
    %v489 = vunpack.c.l.b16 %v455
    %v490 = vunpack.c.l.b16 %v456
    %v491 = vunpack.c.l.b16 %v457
    %v492 = vunpack.c.l.b16 %v458
    %v493 = vunpack.c.l.b16 %v459
    %v494 = vunpack.c.l.b16 %v460
    %v495 = vunpack.c.l.b16 %v461
    %v496 = vunpack.c.l.b16 %v462
    %v497 = vunpack.c.l.b16 %v463
    %v498 = vunpack.c.l.b16 %v464
    %v499 = vunpack.c.l.b16 %v465
    %v500 = vunpack.c.l.b16 %v466
    %v501 = vunpack.c.l.b16 %v467
    %v502 = vunpack.c.l.b16 %v468
    %v503 = vunpack.c.l.b16 %v469
    %v504 = vpack.c.b16 %v489, %v488
    %v505 = vpack.c.b16 %v491, %v490
    %v506 = vpack.c.b16 %v493, %v492
    %v507 = vpack.c.b16 %v495, %v494
    %v508 = vpack.c.b16 %v497, %v496
    %v509 = vpack.c.b16 %v499, %v498
    %v510 = vpack.c.b16 %v501, %v500
    %v511 = vpack.c.b16 %v503, %v502
    %520 = vmatpush.bf16.msra.mxu0 %v511
    %521 = vmatpush.bf16.msra.mxu0 %v510
    %522 = vmatpush.bf16.msra.mxu0 %v509
    %523 = vmatpush.bf16.msra.mxu0 %v508
    %524 = vmatpush.bf16.msra.mxu0 %v507
    %525 = vmatpush.bf16.msra.mxu0 %v506
    %526 = vmatpush.bf16.msra.mxu0 %v505
    %527 = vmatpush.bf16.msra.mxu0 %v504
    %528 = vmatmul.bf16.gmra.mxu0 %v452
    %v529 = vpop.f32.mrf.mxu0
    %v530 = vadd.f32 %v471, %v529
    %v531 = vpop.f32.mrf.mxu0
    %532 = vdwg.mxu0
    %v533 = vrot.slane %v530, 4
    %v534 = vadd.f32 %v530, %v533
    %v535 = vrot.slane %v534, 2
    %v536 = vadd.f32 %v534, %v535
    %v537 = vrot.slane %v536, 1
    %v538 = vadd.f32 %v536, %v537
    %v539 = vmul.f32 %v538, 0.125
    %v540 = vsub.f32 %v530, %v539
    %v541 = vmul.f32 %v540, %v540
    %v542 = vrot.slane %v541, 4
    %v543 = vadd.f32 %v541, %v542
    %v544 = vrot.slane %v543, 2
    %v545 = vadd.f32 %v543, %v544
    %v546 = vrot.slane %v545, 1
    %v547 = vadd.f32 %v545, %v546
    %v548 = vmul.f32 %v547, 0.125
    %v549 = vld [vmem:[%s4 + $0x9] sm:$0x1]
    %v550 = vld [vmem:[%s4 + $0xe] sm:$0x1]
    %v551 = vadd.f32 %v548, 1e-05
    %v552 = vrsqrt.pop %v551
    %v553 = vmul.f32 %v552, %v551
    %v554 = vmul.f32 %v553, %v552
    %v555 = vmul.f32 0.5, %v554
    %v556 = vsub.f32 1.5, %v555
    %v557 = vmul.f32 %v552, %v556
    %vm558 = vweird.f32 %v551
    %vm559 = vweird.f32 %v552
    %vm560 = vmor %vm558, %vm559
    %v561 = vsel %vm560, %v552, %v557
    %v562 = vmul.f32 %v549, %v561
    %v563 = vperm.slane %v562, 0
    %v564 = vmul.f32 %v540, %v563
    %v565 = vperm.slane %v550, 0
    %v566 = vadd.f32 %v564, %v565
    %v567 = vmax.f32 %v566, 0.0
    %v568 = vpack.c.bf16 %v567, %v567
    %v569 = vld [vmem:[%s3] sm:$0xf]
    %v570 = vld [vmem:[%s3 + $0x4] sm:$0xf]
    %v571 = vld [vmem:[%s3 + $0x8] sm:$0xf]
    %v572 = vld [vmem:[%s3 + $0xc] sm:$0xf]
    %v573 = vld [vmem:[%s3 + $0x10] sm:$0xf]
    %v574 = vld [vmem:[%s3 + $0x14] sm:$0xf]
    %v575 = vld [vmem:[%s3 + $0x18] sm:$0xf]
    %v576 = vld [vmem:[%s3 + $0x1c] sm:$0xf]
    %v577 = vld [vmem:[%s3 + $0x20] sm:$0xf]
    %v578 = vld [vmem:[%s3 + $0x24] sm:$0xf]
    %v579 = vld [vmem:[%s3 + $0x28] sm:$0xf]
    %v580 = vld [vmem:[%s3 + $0x2c] sm:$0xf]
    %v581 = vld [vmem:[%s3 + $0x30] sm:$0xf]
    %v582 = vld [vmem:[%s3 + $0x34] sm:$0xf]
    %v583 = vld [vmem:[%s3 + $0x38] sm:$0xf]
    %v584 = vld [vmem:[%s3 + $0x3c] sm:$0xf]
    %v585 = vld [vmem:[%s5] sm:$0x1]
    %v587 = vperm.slane %v585, 0
    %v605 = vunpack.c.l.b16 %v569
    %v606 = vunpack.c.l.b16 %v570
    %v607 = vunpack.c.l.b16 %v571
    %v608 = vunpack.c.l.b16 %v572
    %v609 = vunpack.c.l.b16 %v573
    %v610 = vunpack.c.l.b16 %v574
    %v611 = vunpack.c.l.b16 %v575
    %v612 = vunpack.c.l.b16 %v576
    %v613 = vunpack.c.l.b16 %v577
    %v614 = vunpack.c.l.b16 %v578
    %v615 = vunpack.c.l.b16 %v579
    %v616 = vunpack.c.l.b16 %v580
    %v617 = vunpack.c.l.b16 %v581
    %v618 = vunpack.c.l.b16 %v582
    %v619 = vunpack.c.l.b16 %v583
    %v620 = vunpack.c.l.b16 %v584
    %v621 = vpack.c.b16 %v606, %v605
    %v622 = vpack.c.b16 %v608, %v607
    %v623 = vpack.c.b16 %v610, %v609
    %v624 = vpack.c.b16 %v612, %v611
    %v625 = vpack.c.b16 %v614, %v613
    %v626 = vpack.c.b16 %v616, %v615
    %v627 = vpack.c.b16 %v618, %v617
    %v628 = vpack.c.b16 %v620, %v619
    %637 = vmatpush.bf16.msra.mxu0 %v628
    %638 = vmatpush.bf16.msra.mxu0 %v627
    %639 = vmatpush.bf16.msra.mxu0 %v626
    %640 = vmatpush.bf16.msra.mxu0 %v625
    %641 = vmatpush.bf16.msra.mxu0 %v624
    %642 = vmatpush.bf16.msra.mxu0 %v623
    %643 = vmatpush.bf16.msra.mxu0 %v622
    %644 = vmatpush.bf16.msra.mxu0 %v621
    %645 = vmatmul.bf16.gmra.mxu0 %v568
    %v646 = vpop.f32.mrf.mxu0
    %v647 = vadd.f32 %v587, %v646
    %v648 = vpop.f32.mrf.mxu0
    %649 = vdwg.mxu0
    %650 = vst.msk [vmem:[#allocation5] sm:$0xff] %vm53, %v647
    // Predicated region
    $region30: #{tpu_custom_call.1} parent=1 // pred_check
      _
    $region31: #{tpu_custom_call.1} parent=1 // pred_check_branch
      %652 = sbr.rel (0) target = $region33
    $region32: #{tpu_custom_call.1} parent=1 // pred_region
      %654 = vsyncadd [#allocation4], 0
      %s656 = sshll.u32 [#allocation5], 4
      %s657 = int_to_ptr.vmem [resolvable:$true] %s656
      %s658 = sshll.u32 %s6, 4
      %s659 = int_to_ptr.hbm [resolvable:$true] %s658
      %661 = dma.vmem_to_hbm [thread:$0]  %s657, 128, %s659, [#allocation4]
    $region33: #{tpu_custom_call.1} parent=1 // pred_fallthru
      _
    // Predicated region
    $region34: #{tpu_custom_call.1} parent=1 // pred_check
      _
    $region35: #{tpu_custom_call.1} parent=1 // pred_check_branch
      %663 = sbr.rel (0) target = $region37
    $region36: #{tpu_custom_call.1} parent=1 // pred_region
      %665 = dma.done [#allocation4], 128
    $region37: #{tpu_custom_call.1} parent=1 // pred_fallthru
      _
    %666 = vsyncpa [#allocation3], 1
    %667 = vsyncpa [#allocation4], 1

</llo_original>
